<compile_context>
chip_gen: v7x
topology: tpu7x:2x2x1
jax: 0.10.0
libtpu: 0.0.40
codegen_flags: <defaults>
</compile_context>

<pallas_src>
import functools

import jax
import jax.numpy as jnp
from jax import lax
from jax.experimental import pallas as pl
from jax.experimental.pallas import tpu as pltpu

_MIB = 1 << 20


def _round_up(v, m):
    return ((v + m - 1) // m) * m


def _cdiv(a, b):
    return (a + b - 1) // b


@functools.lru_cache(maxsize=None)
def _vmem_capacity_bytes():
    """Physical VMEM per TensorCore; conservative fallback if query fails."""
    try:
        return int(pltpu.get_tpu_info().vmem_capacity_bytes)
    except Exception:
        return 64 * _MIB   # v7x per-TC capacity (smallest current part)


# ---------------------------------------------------------------------------
# Kernels
# ---------------------------------------------------------------------------
def _ffn_kernel_resident(x_ref, w1_ref, b1_ref, w2_ref, b2_ref, o_ref):
    """1-D grid over row tiles; full (padded) hidden dim processed at once.

    x_ref:  (TM, Cp) bf16      w1_ref: (Hp, Cp) bf16 (W1 stored transposed)
    b1_ref: (1, Hp)  f32       w2_ref: (Hp, Cp) bf16      b2_ref: (1, Cp) f32
    """
    h = lax.dot_general(x_ref[...], w1_ref[...],
                        dimension_numbers=(((1,), (1,)), ((), ())),
                        preferred_element_type=jnp.float32)
    h = jnp.maximum(h + b1_ref[...], 0.0)
    y = jnp.dot(h.astype(w2_ref.dtype), w2_ref[...],
                preferred_element_type=jnp.float32)
    o_ref[...] = (y + b2_ref[...]).astype(o_ref.dtype)


def _ffn_kernel_kblocked(x_ref, w1_ref, b1_ref, w2_ref, b2_ref, o_ref, *acc):
    """2-D grid (row tile, hidden chunk); accumulates the 2nd matmul over k.

    For float32 outputs no scratch is passed and the k-resident output block
    is used directly as the accumulator.
    """
    acc_ref = acc[0] if acc else o_ref
    k = pl.program_id(1)

    @pl.when(k == 0)
    def _():
        # Fold b2 into the accumulator init (no epilogue add needed).
        acc_ref[...] = jnp.broadcast_to(b2_ref[...], acc_ref.shape)

    # Linear 1 chunk (contiguous transposed-W1 rows) + ReLU, f32 accumulation.
    h = lax.dot_general(x_ref[...], w1_ref[...],
                        dimension_numbers=(((1,), (1,)), ((), ())),
                        preferred_element_type=jnp.float32)
    h = jnp.maximum(h + b1_ref[...], 0.0)

    # Linear 2 chunk, accumulated in f32 across the hidden grid axis.
    acc_ref[...] += jnp.dot(h.astype(w2_ref.dtype), w2_ref[...],
                            preferred_element_type=jnp.float32)

    if acc:  # scratch-accumulator path (non-f32 outputs): cast out at last k
        @pl.when(k == pl.num_programs(1) - 1)
        def _():
            o_ref[...] = acc_ref[...].astype(o_ref.dtype)


# ---------------------------------------------------------------------------
# Host-side weight preparation, tile planning, wrapper
# ---------------------------------------------------------------------------
def prepare_ffn_params(w1, b1, w2, b2):
    """One-time pad + cast + layout of the FFN weights (hoisted out of calls).

    Returns (w1t, b1p, w2p, b2p):
      w1t: (Hp, Cp) bf16  -- W1 padded then transposed so hidden-dim chunks
                             are contiguous rows (contiguous DMA),
      b1p: (1, Hp) f32,   w2p: (Hp, Cp) bf16,   b2p: (1, Cp) f32,
    where Cp/Hp are the 128-lane-padded embedding / hidden dims.
    """
    C, H = w1.shape
    Cp, Hp = _round_up(C, 128), _round_up(H, 128)
    w1t = jnp.pad(w1, ((0, Cp - C), (0, Hp - H))).T.astype(jnp.bfloat16)
    b1p = jnp.pad(jnp.reshape(b1, (1, -1)),
                  ((0, 0), (0, Hp - H))).astype(jnp.float32)
    w2p = jnp.pad(w2, ((0, Hp - H), (0, Cp - C))).astype(jnp.bfloat16)
    b2p = jnp.pad(jnp.reshape(b2, (1, -1)),
                  ((0, 0), (0, Cp - C))).astype(jnp.float32)
    return w1t, b1p, w2p, b2p


def _plan(rows, Cp, Hp, out_bytes, tile_rows, tile_h):
    """Pick (tile_rows, tile_h, rows_p, n_row_tiles, resident, vmem_estimate)."""
    budget = _vmem_capacity_bytes() - 12 * _MIB   # headroom for compiler scratch

    def estimate(tr, th, resident):
        io = 2 * tr * Cp * (2 + out_bytes)        # double-buffered x / out tiles
        h = tr * th * 6                           # f32 h intermediate + bf16 cast
        if resident:
            w = Hp * Cp * 4 + Hp * 4 + Cp * 4     # single-buffered (Buffered(1))
            acc = 0
        else:
            w = 2 * (th * Cp * 4 + th * 4) + Cp * 4   # double-buffered chunks
            acc = tr * Cp * 4                     # f32 accumulator / resident out
        return io + h + w + acc

    user_tr, user_th = tile_rows is not None, tile_h is not None

    tr = 1024 if tile_rows is None else tile_rows
    tr = max(16, _round_up(min(tr, rows), 16))

    if user_th:
        th = max(128, min(_round_up(tile_h, 128), Hp))
        while Hp % th:
            th -= 128
    else:
        th = Hp
    resident = th == Hp

    # Shrink tiles until the VMEM estimate fits the per-core budget.
    while estimate(tr, th, resident) > budget:
        if not user_tr and tr > 256:
            tr = max(256, _round_up(tr // 2, 16))
        elif not user_th and th > 128:
            resident = False
            th = max(128, _round_up(th // 2, 128))
            while Hp % th:
                th -= 128
        else:
            break   # smallest (or user-pinned) tiles; vmem_limit still capped

    # Prefer an even count (>= 2) of row tiles so v7x's two TensorCores can
    # split the "parallel" axis; shrink tile_rows rather than padding rows.
    n_tiles = _cdiv(rows, tr)
    if not user_tr and rows > 16 and n_tiles % 2 == 1:
        target = max(2, _round_up(n_tiles, 2))
        tr2 = max(16, _round_up(_cdiv(rows, target), 16))
        if estimate(tr2, th, resident) <= budget:
            tr, n_tiles = tr2, _cdiv(rows, tr2)

    return tr, th, n_tiles * tr, n_tiles, resident, estimate(tr, th, resident)


@functools.partial(jax.jit, static_argnames=("tile_rows", "tile_h"))
def feed_forward(x, w1t, b1, w2, b2, *, tile_rows=None, tile_h=None):
    """y = ReLU(x @ W1 + b1) @ W2 + b2 (Dropout = identity, eval mode).

    `w1t, b1, w2, b2` must come from prepare_ffn_params (pre-padded bf16/f32).
    x: (B, T, C) -> (B, T, C).
    """
    B, T, C = x.shape
    Hp, Cp = w1t.shape
    rows = B * T
    out_dtype = x.dtype
    out_bytes = jnp.dtype(out_dtype).itemsize

    tr, th, rows_p, n_row_tiles, resident, est = _plan(
        rows, Cp, Hp, out_bytes, tile_rows, tile_h)

    # Per-call activation prep only (weights were prepared once, outside).
    x2d = jnp.pad(x.reshape(rows, C),
                  ((0, rows_p - rows), (0, Cp - C))).astype(jnp.bfloat16)

    single = pl.Buffered(1)   # grid-invariant inputs: no double buffering
    if resident:
        grid = (n_row_tiles,)
        kernel = _ffn_kernel_resident
        in_specs = [
            pl.BlockSpec((tr, Cp), lambda i: (i, 0)),
            pl.BlockSpec((Hp, Cp), lambda i: (0, 0), pipeline_mode=single),
            pl.BlockSpec((1, Hp), lambda i: (0, 0), pipeline_mode=single),
            pl.BlockSpec((Hp, Cp), lambda i: (0, 0), pipeline_mode=single),
            pl.BlockSpec((1, Cp), lambda i: (0, 0), pipeline_mode=single),
        ]
        out_specs = pl.BlockSpec((tr, Cp), lambda i: (i, 0))
        scratch = []
        dims = ("parallel",)
        weight_passes = 1
    else:
        grid = (n_row_tiles, Hp // th)
        kernel = _ffn_kernel_kblocked
        in_specs = [
            pl.BlockSpec((tr, Cp), lambda i, k: (i, 0)),
            pl.BlockSpec((th, Cp), lambda i, k: (k, 0)),   # contiguous W1 chunk
            pl.BlockSpec((1, th), lambda i, k: (0, k)),
            pl.BlockSpec((th, Cp), lambda i, k: (k, 0)),   # contiguous W2 chunk
            pl.BlockSpec((1, Cp), lambda i, k: (0, 0), pipeline_mode=single),
        ]
        out_specs = pl.BlockSpec((tr, Cp), lambda i, k: (i, 0))
        # f32 outputs accumulate directly into the (k-resident) output block.
        scratch = ([] if out_dtype == jnp.float32
                   else [pltpu.VMEM((tr, Cp), jnp.float32)])
        dims = ("parallel", "arbitrary")
        weight_passes = n_row_tiles

    cap = _vmem_capacity_bytes()
    vmem_limit = int(min(cap - 4 * _MIB, max(32 * _MIB, int(est * 1.25))))

    w_hbm_bytes = 2 * Hp * Cp * 2 + Hp * 4 + Cp * 4
    cost = pl.CostEstimate(
        flops=4 * rows_p * Cp * Hp,                       # two matmuls
        transcendentals=0,
        bytes_accessed=(rows_p * Cp * (2 + out_bytes)
                        + w_hbm_bytes * weight_passes))

    out2d = pl.pallas_call(
        kernel,
        out_shape=jax.ShapeDtypeStruct((rows_p, Cp), out_dtype),
        grid_spec=pltpu.PrefetchScalarGridSpec(
            num_scalar_prefetch=0,
            grid=grid,
            in_specs=in_specs,
            out_specs=out_specs,
            scratch_shapes=scratch,
        ),
        compiler_params=pltpu.CompilerParams(
            dimension_semantics=dims,
            vmem_limit_bytes=vmem_limit),
        cost_estimate=cost,
    )(x2d, w1t, b1, w2, b2)

    return out2d[:rows, :C].reshape(B, T, C)


# ---------------------------------------------------------------------------
# Deterministic init + references + tests
# ---------------------------------------------------------------------------
def _init_params(key, n_embedding):
    # Deterministic init mirroring torch.nn.Linear shapes (y = x @ W + b).
    h = 4 * n_embedding
    k1, k2, k3, k4 = jax.random.split(key, 4)
    lim1 = 1.0 / jnp.sqrt(n_embedding)
    lim2 = 1.0 / jnp.sqrt(h)
    w1 = jax.random.uniform(k1, (n_embedding, h), jnp.float32, -lim1, lim1)
    b1 = jax.random.uniform(k2, (1, h), jnp.float32, -lim1, lim1)
    w2 = jax.random.uniform(k3, (h, n_embedding), jnp.float32, -lim2, lim2)
    b2 = jax.random.uniform(k4, (1, n_embedding), jnp.float32, -lim2, lim2)
    return w1, b1, w2, b2


def _ref_mixed(x, w1, b1, w2, b2):
    # Pure-JAX reference mirroring the kernel's precision (bf16 ops, f32 acc).
    B, T, C = x.shape
    xb = x.reshape(-1, C).astype(jnp.bfloat16)
    h = jnp.dot(xb, w1.astype(jnp.bfloat16), preferred_element_type=jnp.float32)
    h = jnp.maximum(h + b1.reshape(1, -1), 0.0)
    y = jnp.dot(h.astype(jnp.bfloat16), w2.astype(jnp.bfloat16),
                preferred_element_type=jnp.float32)
    return (y + b2.reshape(1, -1)).reshape(B, T, C).astype(x.dtype)


def _ref_f32(x, w1, b1, w2, b2):
    B, T, C = x.shape
    y = jnp.maximum(x.reshape(-1, C) @ w1 + b1.reshape(1, -1), 0.0)
    y = y @ w2 + b2.reshape(1, -1)
    return y.reshape(B, T, C)


if __name__ == "__main__":
    key = jax.random.PRNGKey(0)
    kx, kp, kx2, kp2 = jax.random.split(key, 4)

    # Test 1: toy module shapes (B=2, T=8, n_embedding=32); auto tiling picks
    # the weight-resident 1-D grid. Dropout -> identity (eval mode).
    n_embedding, B, T = 32, 2, 8
    x = jax.random.normal(kx, (B, T, n_embedding), jnp.float32)
    w1, b1, w2, b2 = _init_params(kp, n_embedding)
    params = prepare_ffn_params(w1, b1, w2, b2)   # one-time hoisted weight prep
    out = jax.block_until_ready(feed_forward(x, *params))
    assert out.shape == x.shape
    assert jnp.allclose(out, _ref_mixed(x, w1, b1, w2, b2),
                        atol=1e-4, rtol=1e-4), "mismatch vs bf16 reference"
    assert jnp.allclose(out, _ref_f32(x, w1, b1, w2, b2),
                        atol=5e-2, rtol=5e-2), "mismatch vs f32 reference"

    # Test 2: non-divisible row count + forced k-blocked hidden axis
    # (f32 output -> accumulates directly into the output block, no scratch).
    n_emb2, B2, T2 = 64, 3, 7
    x2 = jax.random.normal(kx2, (B2, T2, n_emb2), jnp.float32)
    raw2 = _init_params(kp2, n_emb2)
    params2 = prepare_ffn_params(*raw2)
    out2 = jax.block_until_ready(
        feed_forward(x2, *params2, tile_rows=16, tile_h=128))
    assert jnp.allclose(out2, _ref_mixed(x2, *raw2),
                        atol=1e-4, rtol=1e-4), "mismatch (test 2)"

    # Test 3: bf16 activations + k-blocked hidden axis (exercises the f32
    # VMEM scratch accumulator and the bf16 epilogue cast).
    x3 = x2.astype(jnp.bfloat16)
    out3 = jax.block_until_ready(
        feed_forward(x3, *params2, tile_rows=16, tile_h=128))
    assert jnp.allclose(out3.astype(jnp.float32),
                        _ref_mixed(x3, *raw2).astype(jnp.float32),
                        atol=2e-2, rtol=2e-2), "mismatch (test 3)"

    print("KERNEL_OK")
</pallas_src>

<mosaic_0001>
module attributes {stable_mosaic.version = 11 : i64} {
  func.func @_ffn_kernel_resident(%arg0: i32, %arg1: memref<16x128xbf16, #tpu.memory_space<vmem>>, %arg2: memref<128x128xbf16, #tpu.memory_space<vmem>>, %arg3: memref<1x128xf32, #tpu.memory_space<vmem>>, %arg4: memref<128x128xbf16, #tpu.memory_space<vmem>>, %arg5: memref<1x128xf32, #tpu.memory_space<vmem>>, %arg6: memref<16x128xf32, #tpu.memory_space<vmem>>) attributes {dimension_semantics = [#tpu.dimension_semantics<parallel>], iteration_bounds = array<i64: 1>, scalar_prefetch = 0 : i64, scratch_operands = 0 : i64, tpu.core_type = #tpu.core_type<tc>, window_params = [{transform_indices = @transform_0, window_bounds = array<i64: 16, 128>}, {pipeline_mode = #tpu.pipeline_mode<synchronous>, transform_indices = @transform_1, window_bounds = array<i64: 128, 128>}, {pipeline_mode = #tpu.pipeline_mode<synchronous>, transform_indices = @transform_2, window_bounds = array<i64: 1, 128>}, {pipeline_mode = #tpu.pipeline_mode<synchronous>, transform_indices = @transform_3, window_bounds = array<i64: 128, 128>}, {pipeline_mode = #tpu.pipeline_mode<synchronous>, transform_indices = @transform_4, window_bounds = array<i64: 1, 128>}, {transform_indices = @transform_5, window_bounds = array<i64: 16, 128>}]} {
    %c0 = arith.constant 0 : index
    %c0_0 = arith.constant 0 : index
    %0 = vector.load %arg1[%c0, %c0_0] : memref<16x128xbf16, #tpu.memory_space<vmem>>, vector<16x128xbf16>
    %c0_1 = arith.constant 0 : index
    %c0_2 = arith.constant 0 : index
    %1 = vector.load %arg2[%c0_1, %c0_2] : memref<128x128xbf16, #tpu.memory_space<vmem>>, vector<128x128xbf16>
    %cst = arith.constant dense<0.000000e+00> : vector<16x128xf32>
    %2 = tpu.matmul %0, %1, %cst {dimension_numbers = #tpu.dot_dimension_numbers<[1], [1], [0], [0], [0, 0, 1, 0], [], []>} : vector<16x128xbf16>, vector<128x128xbf16>, vector<16x128xf32> -> vector<16x128xf32>
    %c0_3 = arith.constant 0 : index
    %c0_4 = arith.constant 0 : index
    %3 = vector.load %arg3[%c0_3, %c0_4] : memref<1x128xf32, #tpu.memory_space<vmem>>, vector<1x128xf32>
    %4 = vector.broadcast %3 : vector<1x128xf32> to vector<16x128xf32>
    %5 = arith.addf %2, %4 : vector<16x128xf32>
    %cst_5 = arith.constant 0.000000e+00 : f32
    %6 = vector.broadcast %cst_5 : f32 to vector<16x128xf32>
    %7 = arith.maximumf %5, %6 : vector<16x128xf32>
    %8 = arith.truncf %7 : vector<16x128xf32> to vector<16x128xbf16>
    %c0_6 = arith.constant 0 : index
    %c0_7 = arith.constant 0 : index
    %9 = vector.load %arg4[%c0_6, %c0_7] : memref<128x128xbf16, #tpu.memory_space<vmem>>, vector<128x128xbf16>
    %cst_8 = arith.constant dense<0.000000e+00> : vector<16x128xf32>
    %10 = tpu.matmul %8, %9, %cst_8 {dimension_numbers = #tpu.dot_dimension_numbers<[1], [0], [0], [1], [0, 0, 1, 1], [], []>} : vector<16x128xbf16>, vector<128x128xbf16>, vector<16x128xf32> -> vector<16x128xf32>
    %c0_9 = arith.constant 0 : index
    %c0_10 = arith.constant 0 : index
    %11 = vector.load %arg5[%c0_9, %c0_10] : memref<1x128xf32, #tpu.memory_space<vmem>>, vector<1x128xf32>
    %12 = vector.broadcast %11 : vector<1x128xf32> to vector<16x128xf32>
    %13 = arith.addf %10, %12 : vector<16x128xf32>
    %c0_11 = arith.constant 0 : index
    %c0_12 = arith.constant 0 : index
    %14 = vector.load %arg6[%c0_11, %c0_12] : memref<16x128xf32, #tpu.memory_space<vmem>>, vector<16x128xf32>
    tpu.vector_store %arg6[%c0_11, %c0_12], %13 {strides = array<i32>} : memref<16x128xf32, #tpu.memory_space<vmem>>, vector<16x128xf32>,
    return
  }
  func.func @transform_0(%arg0: i32) -> (i32, i32) {
    %c0_i32 = arith.constant 0 : i32
    %c0_i32_0 = arith.constant 0 : i32
    return %arg0, %c0_i32 : i32, i32
  }
  func.func @transform_1(%arg0: i32) -> (i32, i32) {
    %c0_i32 = arith.constant 0 : i32
    %c0_i32_0 = arith.constant 0 : i32
    %c0_i32_1 = arith.constant 0 : i32
    return %c0_i32, %c0_i32_0 : i32, i32
  }
  func.func @transform_2(%arg0: i32) -> (i32, i32) {
    %c0_i32 = arith.constant 0 : i32
    %c0_i32_0 = arith.constant 0 : i32
    %c0_i32_1 = arith.constant 0 : i32
    return %c0_i32, %c0_i32_0 : i32, i32
  }
  func.func @transform_3(%arg0: i32) -> (i32, i32) {
    %c0_i32 = arith.constant 0 : i32
    %c0_i32_0 = arith.constant 0 : i32
    %c0_i32_1 = arith.constant 0 : i32
    return %c0_i32, %c0_i32_0 : i32, i32
  }
  func.func @transform_4(%arg0: i32) -> (i32, i32) {
    %c0_i32 = arith.constant 0 : i32
    %c0_i32_0 = arith.constant 0 : i32
    %c0_i32_1 = arith.constant 0 : i32
    return %c0_i32, %c0_i32_0 : i32, i32
  }
  func.func @transform_5(%arg0: i32) -> (i32, i32) {
    %c0_i32 = arith.constant 0 : i32
    %c0_i32_0 = arith.constant 0 : i32
    return %arg0, %c0_i32 : i32, i32
  }
}

</mosaic_0001>

<llo_original>
// kernel: feed_forward.1
$region0: #{feed_forward.1}
  #allocation0 [shape = 'u32[]', space=smem, size = 0x4, offset = 0x4, fixed_abs, tag = 'smem constant byte address 0x4 - core index']
  #allocation1 [shape = 'u32[144,128]{1,0:T(1,128)}', space=vmem, size = 0x12000, scoped, tag = 'internal scratch']
  %s0 = inlined_call_operand.vmem [shape: bf16[16,128], index: 0, kind: input, shape index: {}]
  %s1 = inlined_call_operand.hbm [shape: bf16[128,128], index: 1, kind: input, shape index: {}]
  %s2 = inlined_call_operand.vmem [shape: f32[1,128], index: 2, kind: input, shape index: {}]
  %s3 = inlined_call_operand.hbm [shape: bf16[128,128], index: 3, kind: input, shape index: {}]
  %s4 = inlined_call_operand.vmem [shape: f32[1,128], index: 4, kind: input, shape index: {}]
  %s5 = inlined_call_operand.vmem [shape: f32[16,128], index: 5, kind: output, shape index: {}]
  %s6 = sld [smem:[#allocation0]]
  $region38: #{feed_forward.1} parent=0
    _
  %s8 = ssub.s32 1, %s6
  %s9 = scalar_select 0, %s8, %s6
  $region1: #{feed_forward.1} parent=0
    #allocation2 [shape = 'u8[32768]{0}', space=vmem, size = 0x8000, scoped, tag = 'input window, operand 1, single buffered']
    #allocation3 [shape = 's32[1]{0}', space=sflag, size = 0x4, scoped, tag = 'scoped memory for feed_forward.1']
    #allocation4 [shape = 'u8[32768]{0}', space=vmem, size = 0x8000, scoped, tag = 'input window, operand 3, single buffered']
    #allocation5 [shape = 's32[1]{0}', space=sflag, size = 0x4, scoped, tag = 'scoped memory for feed_forward.1']
    %10 = vsyncpa [#allocation3], 0
    %11 = vsyncpa [#allocation5], 0
    // Predicated region
    $region2: #{feed_forward.1} parent=1 // pred_check
      _
    $region3: #{feed_forward.1} parent=1 // pred_check_branch
      %13 = sbr.rel (0) target = $region5
    $region4: #{feed_forward.1} parent=1 // pred_region
      _
    $region5: #{feed_forward.1} parent=1 // pred_fallthru
      _
    // Predicated region
    $region6: #{feed_forward.1} parent=1 // pred_check
      _
    $region7: #{feed_forward.1} parent=1 // pred_check_branch
      %15 = sbr.rel (0) target = $region9
    $region8: #{feed_forward.1} parent=1 // pred_region
      %s17 = ssub.s32 1024, 1024
      %18 = vsyncadd [#allocation3], %s17
      %s19 = sshll.u32 [#allocation2], 4
      %s20 = int_to_ptr.vmem [resolvable:$true] %s19
      %25 = dma.hbm_to_vmem [thread:$0]  %s1, 1024, %s20, [#allocation3], 64, 64, 4
    $region9: #{feed_forward.1} parent=1 // pred_fallthru
      _
    // Predicated region
    $region10: #{feed_forward.1} parent=1 // pred_check
      _
    $region11: #{feed_forward.1} parent=1 // pred_check_branch
      %27 = sbr.rel (0) target = $region13
    $region12: #{feed_forward.1} parent=1 // pred_region
      _
    $region13: #{feed_forward.1} parent=1 // pred_fallthru
      _
    // Predicated region
    $region14: #{feed_forward.1} parent=1 // pred_check
      _
    $region15: #{feed_forward.1} parent=1 // pred_check_branch
      %29 = sbr.rel (0) target = $region17
    $region16: #{feed_forward.1} parent=1 // pred_region
      %s31 = ssub.s32 1024, 1024
      %32 = vsyncadd [#allocation5], %s31
      %s33 = sshll.u32 [#allocation4], 4
      %s34 = int_to_ptr.vmem [resolvable:$true] %s33
      %39 = dma.hbm_to_vmem [thread:$0]  %s3, 1024, %s34, [#allocation5], 64, 64, 4
    $region17: #{feed_forward.1} parent=1 // pred_fallthru
      _
    // Predicated region
    $region18: #{feed_forward.1} parent=1 // pred_check
      _
    $region19: #{feed_forward.1} parent=1 // pred_check_branch
      %41 = sbr.rel (0) target = $region21
    $region20: #{feed_forward.1} parent=1 // pred_region
      _
    $region21: #{feed_forward.1} parent=1 // pred_fallthru
      _
    // Predicated region
    $region22: #{feed_forward.1} parent=1 // pred_check
      _
    $region23: #{feed_forward.1} parent=1 // pred_check_branch
      %43 = sbr.rel (0) target = $region25
    $region24: #{feed_forward.1} parent=1 // pred_region
      %44 = dma.done [#allocation3], 1024
    $region25: #{feed_forward.1} parent=1 // pred_fallthru
      _
    // Predicated region
    $region26: #{feed_forward.1} parent=1 // pred_check
      _
    $region27: #{feed_forward.1} parent=1 // pred_check_branch
      %46 = sbr.rel (0) target = $region29
    $region28: #{feed_forward.1} parent=1 // pred_region
      %47 = dma.done [#allocation5], 1024
    $region29: #{feed_forward.1} parent=1 // pred_fallthru
      _
    %v49 = vld [vmem:[%s0] sm:$0xf]
    %v50 = vld [vmem:[%s0 + $0x4] sm:$0xf]
    %v51 = vld [vmem:[#allocation2] sm:$0xf]
    %v52 = vld [vmem:[#allocation2 + $0x4] sm:$0xf]
    %v53 = vld [vmem:[#allocation2 + $0x8] sm:$0xf]
    %v54 = vld [vmem:[#allocation2 + $0xc] sm:$0xf]
    %v55 = vld [vmem:[#allocation2 + $0x10] sm:$0xf]
    %v56 = vld [vmem:[#allocation2 + $0x14] sm:$0xf]
    %v57 = vld [vmem:[#allocation2 + $0x18] sm:$0xf]
    %v58 = vld [vmem:[#allocation2 + $0x1c] sm:$0xf]
    %v59 = vld [vmem:[#allocation2 + $0x20] sm:$0xf]
    %v60 = vld [vmem:[#allocation2 + $0x24] sm:$0xf]
    %v61 = vld [vmem:[#allocation2 + $0x28] sm:$0xf]
    %v62 = vld [vmem:[#allocation2 + $0x2c] sm:$0xf]
    %v63 = vld [vmem:[#allocation2 + $0x30] sm:$0xf]
    %v64 = vld [vmem:[#allocation2 + $0x34] sm:$0xf]
    %v65 = vld [vmem:[#allocation2 + $0x38] sm:$0xf]
    %v66 = vld [vmem:[#allocation2 + $0x3c] sm:$0xf]
    %v67 = vld [vmem:[%s2] sm:$0x1]
    %v69 = vlaneseq
    %v70 = vshrl.u32 %v69, 7
    %v71 = vsub.s32 0, %v70
    %v72 = vrot.slane %v67, %v71
    %v76 = vunpack.c.l.b16 %v49
    %v77 = vunpack.c.l.b16 %v50
    %v78 = vpack.c.b16 %v77, %v76
    %v96 = vunpack.c.l.b16 %v51
    %v97 = vunpack.c.l.b16 %v52
    %v98 = vunpack.c.l.b16 %v53
    %v99 = vunpack.c.l.b16 %v54
    %v100 = vunpack.c.l.b16 %v55
    %v101 = vunpack.c.l.b16 %v56
    %v102 = vunpack.c.l.b16 %v57
    %v103 = vunpack.c.l.b16 %v58
    %v104 = vunpack.c.l.b16 %v59
    %v105 = vunpack.c.l.b16 %v60
    %v106 = vunpack.c.l.b16 %v61
    %v107 = vunpack.c.l.b16 %v62
    %v108 = vunpack.c.l.b16 %v63
    %v109 = vunpack.c.l.b16 %v64
    %v110 = vunpack.c.l.b16 %v65
    %v111 = vunpack.c.l.b16 %v66
    %v112 = vpack.c.b16 %v97, %v96
    %v113 = vpack.c.b16 %v99, %v98
    %v114 = vpack.c.b16 %v101, %v100
    %v115 = vpack.c.b16 %v103, %v102
    %v116 = vpack.c.b16 %v105, %v104
    %v117 = vpack.c.b16 %v107, %v106
    %v118 = vpack.c.b16 %v109, %v108
    %v119 = vpack.c.b16 %v111, %v110
    %128 = vmatprep.subr.bf16.mxu0 0
    %129 = vmatpush1.bf16.xpose.msra.mxu0 %v112
    %130 = vmatprep.subr.bf16.mxu0 0
    %131 = vmatpush1.bf16.xpose.msra.mxu0 %v113
    %132 = vmatprep.subr.bf16.mxu0 0
    %133 = vmatpush1.bf16.xpose.msra.mxu0 %v114
    %134 = vmatprep.subr.bf16.mxu0 0
    %135 = vmatpush1.bf16.xpose.msra.mxu0 %v115
    %136 = vmatprep.subr.bf16.mxu0 0
    %137 = vmatpush1.bf16.xpose.msra.mxu0 %v116
    %138 = vmatprep.subr.bf16.mxu0 0
    %139 = vmatpush1.bf16.xpose.msra.mxu0 %v117
    %140 = vmatprep.subr.bf16.mxu0 0
    %141 = vmatpush1.bf16.xpose.msra.mxu0 %v118
    %142 = vmatprep.subr.bf16.mxu0 0
    %143 = vmatpush1.bf16.xpose.msra.mxu0 %v119
    %144 = vmatprep.subr.bf16.mxu0 0
    %145 = vmatpush1.bf16.xpose.msra.mxu0 0
    %146 = vmatprep.subr.bf16.mxu0 0
    %147 = vmatpush1.bf16.xpose.msra.mxu0 0
    %148 = vmatprep.subr.bf16.mxu0 0
    %149 = vmatpush1.bf16.xpose.msra.mxu0 0
    %150 = vmatprep.subr.bf16.mxu0 0
    %151 = vmatpush1.bf16.xpose.msra.mxu0 0
    %152 = vmatprep.subr.bf16.mxu0 0
    %153 = vmatpush1.bf16.xpose.msra.mxu0 0
    %154 = vmatprep.subr.bf16.mxu0 0
    %155 = vmatpush1.bf16.xpose.msra.mxu0 0
    %156 = vmatprep.subr.bf16.mxu0 0
    %157 = vmatpush1.bf16.xpose.msra.mxu0 0
    %158 = vmatprep.subr.bf16.mxu0 0
    %159 = vmatpush1.bf16.xpose.msra.mxu0 0
    %160 = vmatprep.mubr.bf16.mxu0 0
    %161 = vmatmul.mubr.bf16.gmra.mrb[0].mxu0 %v78
    %v162 = vpop.f32.mrb[0].mxu0
    %v163 = vadd.f32 %v72, %v162
    %v164 = vpop.f32.mrb[0].mxu0
    %v165 = vpop.f32.mrb[0].mxu0
    %v166 = vadd.f32 %v72, %v165
    %v167 = vpop.f32.mrb[0].mxu0
    %168 = vdwg.mxu0
    %v169 = vmax.f32 %v163, 0.0
    %v170 = vmax.f32 %v166, 0.0
    %v171 = vpack.c.bf16 %v170, %v169
    %v172 = vld [vmem:[#allocation4] sm:$0xf]
    %v173 = vld [vmem:[#allocation4 + $0x4] sm:$0xf]
    %v174 = vld [vmem:[#allocation4 + $0x8] sm:$0xf]
    %v175 = vld [vmem:[#allocation4 + $0xc] sm:$0xf]
    %v176 = vld [vmem:[#allocation4 + $0x10] sm:$0xf]
    %v177 = vld [vmem:[#allocation4 + $0x14] sm:$0xf]
    %v178 = vld [vmem:[#allocation4 + $0x18] sm:$0xf]
    %v179 = vld [vmem:[#allocation4 + $0x1c] sm:$0xf]
    %v180 = vld [vmem:[#allocation4 + $0x20] sm:$0xf]
    %v181 = vld [vmem:[#allocation4 + $0x24] sm:$0xf]
    %v182 = vld [vmem:[#allocation4 + $0x28] sm:$0xf]
    %v183 = vld [vmem:[#allocation4 + $0x2c] sm:$0xf]
    %v184 = vld [vmem:[#allocation4 + $0x30] sm:$0xf]
    %v185 = vld [vmem:[#allocation4 + $0x34] sm:$0xf]
    %v186 = vld [vmem:[#allocation4 + $0x38] sm:$0xf]
    %v187 = vld [vmem:[#allocation4 + $0x3c] sm:$0xf]
    %v188 = vld [vmem:[%s4] sm:$0x1]
    %v190 = vlaneseq
    %v191 = vshrl.u32 %v190, 7
    %v192 = vsub.s32 0, %v191
    %v193 = vrot.slane %v188, %v192
    %v211 = vunpack.c.l.b16 %v172
    %v212 = vunpack.c.l.b16 %v173
    %v213 = vunpack.c.l.b16 %v174
    %v214 = vunpack.c.l.b16 %v175
    %v215 = vunpack.c.l.b16 %v176
    %v216 = vunpack.c.l.b16 %v177
    %v217 = vunpack.c.l.b16 %v178
    %v218 = vunpack.c.l.b16 %v179
    %v219 = vunpack.c.l.b16 %v180
    %v220 = vunpack.c.l.b16 %v181
    %v221 = vunpack.c.l.b16 %v182
    %v222 = vunpack.c.l.b16 %v183
    %v223 = vunpack.c.l.b16 %v184
    %v224 = vunpack.c.l.b16 %v185
    %v225 = vunpack.c.l.b16 %v186
    %v226 = vunpack.c.l.b16 %v187
    %v227 = vpack.c.b16 %v212, %v211
    %v228 = vpack.c.b16 %v214, %v213
    %v229 = vpack.c.b16 %v216, %v215
    %v230 = vpack.c.b16 %v218, %v217
    %v231 = vpack.c.b16 %v220, %v219
    %v232 = vpack.c.b16 %v222, %v221
    %v233 = vpack.c.b16 %v224, %v223
    %v234 = vpack.c.b16 %v226, %v225
    %243 = vmatprep.subr.bf16.mxu0 0
    %244 = vmatpush1.bf16.msra.mxu0 %v227
    %245 = vmatprep.subr.bf16.mxu0 0
    %246 = vmatpush1.bf16.msra.mxu0 %v228
    %247 = vmatprep.subr.bf16.mxu0 0
    %248 = vmatpush1.bf16.msra.mxu0 %v229
    %249 = vmatprep.subr.bf16.mxu0 0
    %250 = vmatpush1.bf16.msra.mxu0 %v230
    %251 = vmatprep.subr.bf16.mxu0 0
    %252 = vmatpush1.bf16.msra.mxu0 %v231
    %253 = vmatprep.subr.bf16.mxu0 0
    %254 = vmatpush1.bf16.msra.mxu0 %v232
    %255 = vmatprep.subr.bf16.mxu0 0
    %256 = vmatpush1.bf16.msra.mxu0 %v233
    %257 = vmatprep.subr.bf16.mxu0 0
    %258 = vmatpush1.bf16.msra.mxu0 %v234
    %259 = vmatprep.subr.bf16.mxu0 0
    %260 = vmatpush1.bf16.msra.mxu0 0
    %261 = vmatprep.subr.bf16.mxu0 0
    %262 = vmatpush1.bf16.msra.mxu0 0
    %263 = vmatprep.subr.bf16.mxu0 0
    %264 = vmatpush1.bf16.msra.mxu0 0
    %265 = vmatprep.subr.bf16.mxu0 0
    %266 = vmatpush1.bf16.msra.mxu0 0
    %267 = vmatprep.subr.bf16.mxu0 0
    %268 = vmatpush1.bf16.msra.mxu0 0
    %269 = vmatprep.subr.bf16.mxu0 0
    %270 = vmatpush1.bf16.msra.mxu0 0
    %271 = vmatprep.subr.bf16.mxu0 0
    %272 = vmatpush1.bf16.msra.mxu0 0
    %273 = vmatprep.subr.bf16.mxu0 0
    %274 = vmatpush1.bf16.msra.mxu0 0
    %275 = vmatprep.mubr.bf16.mxu0 0
    %276 = vmatmul.mubr.bf16.gmra.mrb[0].mxu0 %v171
    %v277 = vpop.f32.mrb[0].mxu0
    %v278 = vadd.f32 %v193, %v277
    %v279 = vpop.f32.mrb[0].mxu0
    %v280 = vpop.f32.mrb[0].mxu0
    %v281 = vadd.f32 %v193, %v280
    %v282 = vpop.f32.mrb[0].mxu0
    %283 = vdwg.mxu0
    %284 = vst [vmem:[%s5] sm:$0xff] %v278
    %285 = vst [vmem:[%s5 + $0x8] sm:$0xff] %v281
    // Predicated region
    $region30: #{feed_forward.1} parent=1 // pred_check
      _
    $region31: #{feed_forward.1} parent=1 // pred_check_branch
      %287 = sbr.rel (0) target = $region33
    $region32: #{feed_forward.1} parent=1 // pred_region
      _
    $region33: #{feed_forward.1} parent=1 // pred_fallthru
      _
    // Predicated region
    $region34: #{feed_forward.1} parent=1 // pred_check
      _
    $region35: #{feed_forward.1} parent=1 // pred_check_branch
      %289 = sbr.rel (0) target = $region37
    $region36: #{feed_forward.1} parent=1 // pred_region
      _
    $region37: #{feed_forward.1} parent=1 // pred_fallthru
      _
    %290 = vsyncpa [#allocation3], 1
    %291 = vsyncpa [#allocation5], 1

</llo_original>
